<compile_context>
chip_gen: v6e
topology: v6e:2x2x1
jax: 0.10.0
libtpu: 0.0.40
codegen_flags: <defaults>
</compile_context>

<pallas_src>
import jax
import jax.numpy as jnp
from jax.experimental import pallas as pl
from jax.experimental.pallas import tpu as pltpu


def _add_noise_kernel(x_ref, noise_ref, scale_ref, o_ref):
    # x_ref:     (1, bc, bhw)  input tile
    # noise_ref: (1, 1,  bhw)  same noise for every channel of this batch
    # scale_ref: (1, bc, 1)    per-channel scale
    # o_ref:     (1, bc, bhw)
    o_ref[...] = x_ref[...] + scale_ref[...] * noise_ref[...]


def _choose_tiles(C, HW, itemsize, target_bytes=2 << 20):
    """Pick (bc, bhw) so one x tile is ~<=2 MiB and blocks satisfy (8,128)."""
    # Spatial tile: full HW unless it is huge AND cleanly divisible by 128.
    if HW * itemsize <= target_bytes or HW % 128 != 0:
        bhw = HW
    else:
        bhw = max(128, ((target_bytes // itemsize) // 128) * 128)
        bhw = min(bhw, HW)
    # Channel tile: full C if small; otherwise a multiple of 8 near the budget.
    if C <= 8:
        bc = C
    else:
        bc = max(8, ((target_bytes // (bhw * itemsize)) // 8) * 8)
        bc = min(bc, (C // 8) * 8)
    return bc, bhw


def add_noise_forward(x, scale_factors, noise=None, *, key=None):
    """Pallas equivalent of AddNoise.forward.

    x:             (N, C, H, W)
    scale_factors: (1, C, 1, 1) for per_channel=True, or (1, 1, 1, 1)
    noise:         optional (N, 1, H, W); if None, drawn ~N(0,1) from `key`.
    """
    N, C, H, W = x.shape
    HW = H * W
    itemsize = jnp.dtype(x.dtype).itemsize

    if noise is None:
        if key is None:
            raise ValueError("either `noise` or `key` must be provided")
        noise = jax.random.normal(key, (N, 1, H, W), dtype=jnp.float32)
    noise = noise.astype(x.dtype)

    # Metadata-only reshapes: fold (H, W) into one lane-dense last dim.
    x3 = x.reshape(N, C, HW)
    n3 = noise.reshape(N, 1, HW)
    s3 = scale_factors.reshape(1, -1, 1).astype(x.dtype)
    if s3.shape[1] == 1 and C > 1:            # per_channel=False (tiny array)
        s3 = jnp.broadcast_to(s3, (1, C, 1))

    bc, bhw = _choose_tiles(C, HW, itemsize)
    grid = (N, pl.cdiv(C, bc), pl.cdiv(HW, bhw))

    out = pl.pallas_call(
        _add_noise_kernel,
        out_shape=jax.ShapeDtypeStruct((N, C, HW), x.dtype),
        grid_spec=pltpu.PrefetchScalarGridSpec(
            num_scalar_prefetch=0,
            grid=grid,
            in_specs=[
                pl.BlockSpec((1, bc, bhw), lambda n, c, s: (n, c, s)),  # x
                pl.BlockSpec((1, 1, bhw), lambda n, c, s: (n, 0, s)),   # noise
                pl.BlockSpec((1, bc, 1), lambda n, c, s: (0, c, 0)),    # scale
            ],
            out_specs=pl.BlockSpec((1, bc, bhw), lambda n, c, s: (n, c, s)),
        ),
        compiler_params=pltpu.CompilerParams(
            dimension_semantics=("parallel", "parallel", "parallel"),
        ),
        cost_estimate=pl.CostEstimate(
            flops=2 * N * C * HW,
            transcendentals=0,
            bytes_accessed=(2 * N * C * HW + N * HW + C) * itemsize,
        ),
    )(x3, n3, s3)

    return out.reshape(N, C, H, W)


if __name__ == "__main__":
    key = jax.random.PRNGKey(0)
    kx, kn = jax.random.split(key)

    N, C, H, W = 2, 4, 16, 16
    x = jax.random.normal(kx, (N, C, H, W), dtype=jnp.float32)
    # PyTorch inits scale_factors to 0; use nonzero deterministic values so
    # the test actually exercises the scale * noise + x path.
    scale = (jnp.arange(C, dtype=jnp.float32).reshape(1, C, 1, 1) + 1.0) * 0.1
    noise = jax.random.normal(kn, (N, 1, H, W), dtype=jnp.float32)

    # Path 1: caller-provided noise (also how fixed=True is reproduced).
    y = jax.block_until_ready(add_noise_forward(x, scale, noise=noise))
    ref = x + scale * noise
    assert y.shape == x.shape and y.dtype == x.dtype
    assert bool(jnp.allclose(y, ref, atol=1e-6, rtol=1e-6)), \
        float(jnp.max(jnp.abs(y - ref)))

    # Path 2: noise drawn inside the wrapper from a PRNG key.
    y2 = jax.block_until_ready(add_noise_forward(x, scale, key=kn))
    assert y2.shape == x.shape and y2.dtype == x.dtype

    print("KERNEL_OK")
</pallas_src>

<mosaic_0001>
module attributes {stable_mosaic.version = 11 : i64} {
  func.func @_add_noise_kernel(%arg0: i32, %arg1: i32, %arg2: i32, %arg3: memref<1x4x256xf32, #tpu.memory_space<vmem>>, %arg4: memref<1x1x256xf32, #tpu.memory_space<vmem>>, %arg5: memref<1x4x1xf32, #tpu.memory_space<vmem>>, %arg6: memref<1x4x256xf32, #tpu.memory_space<vmem>>) attributes {dimension_semantics = [#tpu.dimension_semantics<parallel>, #tpu.dimension_semantics<parallel>, #tpu.dimension_semantics<parallel>], iteration_bounds = array<i64: 2, 1, 1>, scalar_prefetch = 0 : i64, scratch_operands = 0 : i64, tpu.core_type = #tpu.core_type<tc>, window_params = [{transform_indices = @transform_0, window_bounds = array<i64: 1, 4, 256>}, {transform_indices = @transform_1, window_bounds = array<i64: 1, 1, 256>}, {transform_indices = @transform_2, window_bounds = array<i64: 1, 4, 1>}, {transform_indices = @transform_3, window_bounds = array<i64: 1, 4, 256>}]} {
    %c0 = arith.constant 0 : index
    %c0_0 = arith.constant 0 : index
    %c0_1 = arith.constant 0 : index
    %0 = vector.load %arg3[%c0, %c0_0, %c0_1] : memref<1x4x256xf32, #tpu.memory_space<vmem>>, vector<1x4x256xf32>
    %c0_2 = arith.constant 0 : index
    %c0_3 = arith.constant 0 : index
    %c0_4 = arith.constant 0 : index
    %1 = vector.load %arg5[%c0_2, %c0_3, %c0_4] : memref<1x4x1xf32, #tpu.memory_space<vmem>>, vector<1x4x1xf32>
    %c0_5 = arith.constant 0 : index
    %c0_6 = arith.constant 0 : index
    %c0_7 = arith.constant 0 : index
    %2 = vector.load %arg4[%c0_5, %c0_6, %c0_7] : memref<1x1x256xf32, #tpu.memory_space<vmem>>, vector<1x1x256xf32>
    %3 = vector.broadcast %1 : vector<1x4x1xf32> to vector<1x4x256xf32>
    %4 = vector.broadcast %2 : vector<1x1x256xf32> to vector<1x4x256xf32>
    %5 = arith.mulf %3, %4 : vector<1x4x256xf32>
    %6 = arith.addf %0, %5 : vector<1x4x256xf32>
    %c0_8 = arith.constant 0 : index
    %c0_9 = arith.constant 0 : index
    %c0_10 = arith.constant 0 : index
    %7 = vector.load %arg6[%c0_8, %c0_9, %c0_10] : memref<1x4x256xf32, #tpu.memory_space<vmem>>, vector<1x4x256xf32>
    tpu.vector_store %arg6[%c0_8, %c0_9, %c0_10], %6 {strides = array<i32>} : memref<1x4x256xf32, #tpu.memory_space<vmem>>, vector<1x4x256xf32>,
    return
  }
  func.func @transform_0(%arg0: i32, %arg1: i32, %arg2: i32) -> (i32, i32, i32) {
    %c0_i32 = arith.constant 0 : i32
    return %arg0, %arg1, %arg2 : i32, i32, i32
  }
  func.func @transform_1(%arg0: i32, %arg1: i32, %arg2: i32) -> (i32, i32, i32) {
    %c0_i32 = arith.constant 0 : i32
    %c0_i32_0 = arith.constant 0 : i32
    return %arg0, %c0_i32, %arg2 : i32, i32, i32
  }
  func.func @transform_2(%arg0: i32, %arg1: i32, %arg2: i32) -> (i32, i32, i32) {
    %c0_i32 = arith.constant 0 : i32
    %c0_i32_0 = arith.constant 0 : i32
    %c0_i32_1 = arith.constant 0 : i32
    return %c0_i32, %arg1, %c0_i32_0 : i32, i32, i32
  }
  func.func @transform_3(%arg0: i32, %arg1: i32, %arg2: i32) -> (i32, i32, i32) {
    %c0_i32 = arith.constant 0 : i32
    return %arg0, %arg1, %arg2 : i32, i32, i32
  }
}

</mosaic_0001>

<llo_original>
// kernel: tpu_custom_call.1
$region0: #{tpu_custom_call.1}
  #allocation0 [shape = 'u32[]', space=smem, size = 0x4, offset = 0x4, fixed_abs, tag = 'smem constant byte address 0x4 - core index']
  #allocation1 [shape = 'u32[144,128]{1,0:T(1,128)}', space=vmem, size = 0x12000, scoped, tag = 'internal scratch']
  %s0 = inlined_call_operand.hbm [shape: f32[2,4,256], index: 0, kind: input, shape index: {}]
  %s1 = inlined_call_operand.vmem [shape: f32[2,1,256], index: 1, kind: input, shape index: {}]
  %s2 = inlined_call_operand.vmem [shape: f32[1,4,1], index: 2, kind: input, shape index: {}]
  %s3 = inlined_call_operand.hbm [shape: f32[2,4,256], index: 3, kind: output, shape index: {}]
  %s4 = sld [smem:[#allocation0]]
  $region49: #{tpu_custom_call.1} parent=0
    _
  %s6 = ssub.s32 1, %s4
  %s7 = scalar_select 0, %s6, %s4
  $region1: #{tpu_custom_call.1} parent=0
    #allocation2 [shape = 'u8[8192]{0}', space=vmem, size = 0x2000, scoped, tag = 'input window, operand 0']
    #allocation3 [shape = 's32[2]{0}', space=sflag, size = 0x8, scoped, tag = 'scoped memory for tpu_custom_call.1']
    #allocation4 [shape = 's32[2]{0}', space=sflag, size = 0x8, scoped, tag = 'scoped memory for tpu_custom_call.1']
    #allocation5 [shape = 'u8[8192]{0}', space=vmem, size = 0x2000, scoped, tag = 'output window, operand 0']
    %8 = vsyncpa [#allocation3], 0
    %s9 = scalar_lea.sflag [#allocation3], 1
    %10 = vsyncpa %s9, 0
    %11 = vsyncpa [#allocation4], 0
    %s12 = scalar_lea.sflag [#allocation4], 1
    %13 = vsyncpa %s12, 0
    loop: start=0, step=1, limit=4
    $region2: #{tpu_custom_call.1} parent=1 // loop_pre_header
      _
    $region3: #{tpu_custom_call.1} parent=1 // loop_header
      %s15 = sphi 0, %s19
      %p16 = scmp.ge.s32.totalorder %s15, 4
      %s22 = sphi 0, %s41
      %s23 = sphi 0, %s37
      %s24 = sphi 0, %s33
      %s25 = sphi 0, %s22
      %s26 = sphi 0, %s23
      %s27 = sphi 0, %s24
      %s28 = sphi 0, %s25
      %s29 = sphi 0, %s26
      %s30 = sphi 0, %s27
      %s48 = sphi 0, %s50
      %s51 = sphi 0, %s48
      %s52 = sphi 0, %s51
      %s68 = sphi 0, %s52
      %s76 = sphi 0, %s78
      %s79 = sphi 0, %s76
      %s80 = sphi 0, %s79
      %s96 = sphi 0, %s80
      %s102 = sphi 0, %s104
      %s105 = sphi 0, %s102
      %s106 = sphi 0, %s105
      %s122 = sphi 0, %s106
      %s132 = sphi 0, %s134
      %s135 = sphi 0, %s132
      %s136 = sphi 0, %s135
      %s152 = sphi 0, %s136
    $region4: #{tpu_custom_call.1} parent=1 // loop_header_branch
      %18 = sbr.rel (%p16) target = $region8
    $region5: #{tpu_custom_call.1} parent=1 // loop_body
      %s20 = ssub.s32 %s15, 1
      %s21 = ssub.s32 %s15, 2
      %s31 = sadd.s32 1, %s24
      %p32 = scmp.ge.s32.totalorder %s31, 1
      %s33 = scalar_select %p32, 0, %s31
      %s34 = sadd.s32 1, %s23
      %s35 = scalar_select %p32, %s34, %s23
      %p36 = scmp.ge.s32.totalorder %s35, 1
      %s37 = scalar_select %p36, 0, %s35
      %s38 = sadd.s32 1, %s22
      %s39 = scalar_select %p36, %s38, %s22
      %p40 = scmp.ge.s32.totalorder %s39, 2
      %s41 = scalar_select %p40, 0, %s39
      %s42 = ssub.s32 %s22, %s41
      %s43 = ssub.s32 %s23, %s37
      %s44 = sor.u32 %s42, %s43
      %s45 = ssub.s32 %s24, %s33
      %s46 = sor.u32 %s44, %s45
      %p47 = scmp.eq.s32.totalorder %s46, 0
      %s49 = sadd.s32 %s48, 1
      %s50 = scalar_select %p47, %s48, %s49
      %p53 = pneg %p47
      %p54 = scmp.eq.s32.totalorder %s15, 1
      %p55 = por %p53, %p54
      %p56 = scmp.ne.s32.totalorder %s48, %s51
      %p57 = scmp.eq.s32.totalorder %s15, 0
      %p58 = por %p56, %p57
      %p59 = scmp.ne.s32.totalorder %s48, %s51
      %p60 = scmp.eq.s32.totalorder %s20, 1
      %p61 = por %p59, %p60
      %p62 = scmp.ne.s32.totalorder %s51, %s52
      %p63 = scmp.eq.s32.totalorder %s20, 0
      %p64 = por %p62, %p63
      %p65 = scmp.ne.s32.totalorder %s51, %s52
      %p66 = scmp.eq.s32.totalorder %s21, 1
      %p67 = por %p65, %p66
      %p69 = scmp.ne.s32.totalorder %s52, %s68
      %p70 = scmp.eq.s32.totalorder %s21, 0
      %p71 = por %p69, %p70
      %s72 = ssub.s32 %s22, %s41
      %s73 = ssub.s32 %s24, %s33
      %s74 = sor.u32 %s72, %s73
      %p75 = scmp.eq.s32.totalorder %s74, 0
      %s77 = sadd.s32 %s76, 1
      %s78 = scalar_select %p75, %s76, %s77
      %p81 = pneg %p75
      %p82 = scmp.eq.s32.totalorder %s15, 1
      %p83 = por %p81, %p82
      %p84 = scmp.ne.s32.totalorder %s76, %s79
      %p85 = scmp.eq.s32.totalorder %s15, 0
      %p86 = por %p84, %p85
      %p87 = scmp.ne.s32.totalorder %s76, %s79
      %p88 = scmp.eq.s32.totalorder %s20, 1
      %p89 = por %p87, %p88
      %p90 = scmp.ne.s32.totalorder %s79, %s80
      %p91 = scmp.eq.s32.totalorder %s20, 0
      %p92 = por %p90, %p91
      %p93 = scmp.ne.s32.totalorder %s79, %s80
      %p94 = scmp.eq.s32.totalorder %s21, 1
      %p95 = por %p93, %p94
      %p97 = scmp.ne.s32.totalorder %s80, %s96
      %p98 = scmp.eq.s32.totalorder %s21, 0
      %p99 = por %p97, %p98
      %s100 = ssub.s32 %s23, %s37
      %p101 = scmp.eq.s32.totalorder %s100, 0
      %s103 = sadd.s32 %s102, 1
      %s104 = scalar_select %p101, %s102, %s103
      %p107 = pneg %p101
      %p108 = scmp.eq.s32.totalorder %s15, 1
      %p109 = por %p107, %p108
      %p110 = scmp.ne.s32.totalorder %s102, %s105
      %p111 = scmp.eq.s32.totalorder %s15, 0
      %p112 = por %p110, %p111
      %p113 = scmp.ne.s32.totalorder %s102, %s105
      %p114 = scmp.eq.s32.totalorder %s20, 1
      %p115 = por %p113, %p114
      %p116 = scmp.ne.s32.totalorder %s105, %s106
      %p117 = scmp.eq.s32.totalorder %s20, 0
      %p118 = por %p116, %p117
      %p119 = scmp.ne.s32.totalorder %s105, %s106
      %p120 = scmp.eq.s32.totalorder %s21, 1
      %p121 = por %p119, %p120
      %p123 = scmp.ne.s32.totalorder %s106, %s122
      %p124 = scmp.eq.s32.totalorder %s21, 0
      %p125 = por %p123, %p124
      %s126 = ssub.s32 %s22, %s41
      %s127 = ssub.s32 %s23, %s37
      %s128 = sor.u32 %s126, %s127
      %s129 = ssub.s32 %s24, %s33
      %s130 = sor.u32 %s128, %s129
      %p131 = scmp.eq.s32.totalorder %s130, 0
      %s133 = sadd.s32 %s132, 1
      %s134 = scalar_select %p131, %s132, %s133
      %p137 = pneg %p131
      %p138 = scmp.eq.s32.totalorder %s15, 1
      %p139 = por %p137, %p138
      %p140 = scmp.ne.s32.totalorder %s132, %s135
      %p141 = scmp.eq.s32.totalorder %s15, 0
      %p142 = por %p140, %p141
      %p143 = scmp.ne.s32.totalorder %s132, %s135
      %p144 = scmp.eq.s32.totalorder %s20, 1
      %p145 = por %p143, %p144
      %p146 = scmp.ne.s32.totalorder %s135, %s136
      %p147 = scmp.eq.s32.totalorder %s20, 0
      %p148 = por %p146, %p147
      %p149 = scmp.ne.s32.totalorder %s135, %s136
      %p150 = scmp.eq.s32.totalorder %s21, 1
      %p151 = por %p149, %p150
      %p153 = scmp.ne.s32.totalorder %s136, %s152
      %p154 = scmp.eq.s32.totalorder %s21, 0
      %p155 = por %p153, %p154
      %p156 = scmp.le.s32.totalorder 1, %s15
      %p157 = scmp.lt.s32.totalorder %s15, 3
      %p158 = pnand %p156, %p157
      %p159 = pneg %p158
      // Predicated region
      $region9: #{tpu_custom_call.1} parent=5 // pred_check
        _
      $region10: #{tpu_custom_call.1} parent=5 // pred_check_branch
        %161 = sbr.rel (%p158) target = $region12
      $region11: #{tpu_custom_call.1} parent=5 // pred_region
        %s162 = ssub.s32 %s15, 1
        // Predicated region
        $region13: #{tpu_custom_call.1} parent=11 // pred_check
          %p163 = pneg %p118
        $region14: #{tpu_custom_call.1} parent=11 // pred_check_branch
          %165 = sbr.rel (%p163) target = $region16
        $region15: #{tpu_custom_call.1} parent=11 // pred_region
          %p166 = scmp.lt.s32.totalorder %s26, 0
          %s167 = scalar_select %p166, %s26, 0
          %s168 = smul.addr %s167, 4
          %s169 = scalar_lea.vmem %s2, %s168
        $region16: #{tpu_custom_call.1} parent=11 // pred_fallthru
          _
      $region12: #{tpu_custom_call.1} parent=5 // pred_fallthru
        _
      %p170 = scmp.lt.s32.totalorder %s15, 2
      // Predicated region
      $region17: #{tpu_custom_call.1} parent=5 // pred_check
        %p171 = pneg %p170
      $region18: #{tpu_custom_call.1} parent=5 // pred_check_branch
        %173 = sbr.rel (%p171) target = $region20
      $region19: #{tpu_custom_call.1} parent=5 // pred_region
        // Predicated region
        $region21: #{tpu_custom_call.1} parent=19 // pred_check
          %p174 = pneg %p58
        $region22: #{tpu_custom_call.1} parent=19 // pred_check_branch
          %176 = sbr.rel (%p174) target = $region24
        $region23: #{tpu_custom_call.1} parent=19 // pred_region
          %s177 = sand.u32 %s48, 1
          %s178 = scalar_lea.sflag [#allocation3], %s177
          %s179 = sand.u32 %s48, 1
          %s180 = smul.addr %s179, 8
          %s181 = scalar_lea.vmem [#allocation2], %s180
          %s182 = smul.u32 2, %s24
          %s184 = ssub.s32 128, 128
          %185 = vsyncadd %s178, %s184
          %s186 = smul.addr %s23, 2
          %s187 = sadd.s32 %s182, %s186
          %s188 = smul.addr %s22, 2
          %s189 = sadd.s32 %s187, %s188
          %s190 = smul.addr %s189, 64
          %s191 = scalar_lea.hbm %s0, %s190
          %s193 = sshll.u32 %s181, 4
          %s194 = int_to_ptr.vmem [resolvable:$true] %s193
          %196 = dma.hbm_to_vmem [thread:$0]  %s191, 128, %s194, %s178
        $region24: #{tpu_custom_call.1} parent=19 // pred_fallthru
          _
        // Predicated region
        $region25: #{tpu_custom_call.1} parent=19 // pred_check
          %p197 = pneg %p86
        $region26: #{tpu_custom_call.1} parent=19 // pred_check_branch
          %199 = sbr.rel (%p197) target = $region28
        $region27: #{tpu_custom_call.1} parent=19 // pred_region
          %s200 = smul.u32 2, %s24
          %p201 = scmp.lt.s32.totalorder %s22, 1
          %s202 = scalar_select %p201, %s22, 1
          %p203 = scmp.lt.s32.totalorder %s200, 1
          %s204 = scalar_select %p203, %s200, 1
          %s205 = smul.addr %s202, 2
          %s206 = sadd.s32 %s204, %s205
          %s207 = scalar_lea.vmem %s1, %s206
          %s208 = smul.u32 2, %s24
        $region28: #{tpu_custom_call.1} parent=19 // pred_fallthru
          _
      $region20: #{tpu_custom_call.1} parent=5 // pred_fallthru
        _
      %p209 = scmp.le.s32.totalorder 1, %s15
      %p210 = scmp.lt.s32.totalorder %s15, 3
      %p211 = pnand %p209, %p210
      %p212 = pneg %p211
      // Predicated region
      $region29: #{tpu_custom_call.1} parent=5 // pred_check
        _
      $region30: #{tpu_custom_call.1} parent=5 // pred_check_branch
        %214 = sbr.rel (%p211) target = $region32
      $region31: #{tpu_custom_call.1} parent=5 // pred_region
        %s215 = ssub.s32 %s15, 1
        %s216 = sand.u32 %s51, 1
        %s217 = scalar_lea.sflag [#allocation3], %s216
        %s218 = sand.u32 %s51, 1
        %s219 = smul.addr %s218, 8
        %s220 = scalar_lea.vmem [#allocation2], %s219
        // Predicated region
        $region33: #{tpu_custom_call.1} parent=31 // pred_check
          %p221 = pneg %p64
        $region34: #{tpu_custom_call.1} parent=31 // pred_check_branch
          %223 = sbr.rel (%p221) target = $region36
        $region35: #{tpu_custom_call.1} parent=31 // pred_region
          %224 = dma.done %s217, 128
        $region36: #{tpu_custom_call.1} parent=31 // pred_fallthru
          _
        %s225 = sand.u32 %s51, 1
        %s226 = scalar_lea.sflag [#allocation3], %s225
        %s227 = sand.u32 %s51, 1
        %s228 = smul.addr %s227, 8
        %s229 = scalar_lea.vmem [#allocation2], %s228
        %p230 = pneg %p64
        %p231 = pneg %p61
        %s232 = smul.u32 2, %s27
        %p233 = scmp.lt.s32.totalorder %s25, 1
        %s234 = scalar_select %p233, %s25, 1
        %p235 = scmp.lt.s32.totalorder %s232, 1
        %s236 = scalar_select %p235, %s232, 1
        %s237 = smul.addr %s234, 2
        %s238 = sadd.s32 %s236, %s237
        %s239 = scalar_lea.vmem %s1, %s238
        %p240 = pneg %p92
        %p241 = pneg %p89
        %p242 = scmp.lt.s32.totalorder %s26, 0
        %s243 = scalar_select %p242, %s26, 0
        %s244 = smul.addr %s243, 4
        %s245 = scalar_lea.vmem %s2, %s244
        %p246 = pneg %p118
        %p247 = pneg %p115
        %p248 = pneg %p148
        %p249 = pneg %p145
        %s250 = sand.u32 %s135, 1
        %s251 = scalar_lea.sflag [#allocation4], %s250
        %s252 = sand.u32 %s135, 1
        %s253 = smul.addr %s252, 8
        %s254 = scalar_lea.vmem [#allocation5], %s253
        %s255 = smul.u32 2, %s27
        %s256 = smul.u32 2, %s27
        %p257 = scmp.lt.s32.totalorder %s25, 1
        %s258 = scalar_select %p257, %s25, 1
        %p259 = scmp.lt.s32.totalorder %s256, 1
        %s260 = scalar_select %p259, %s256, 1
        %s261 = smul.addr %s258, 2
        %s262 = sadd.s32 %s260, %s261
        %s263 = scalar_lea.vmem %s1, %s262
        %s264 = smul.u32 2, %s27
        %p265 = scmp.lt.s32.totalorder %s26, 0
        %s266 = scalar_select %p265, %s26, 0
        %s267 = smul.addr %s266, 4
        %s268 = scalar_lea.vmem %s2, %s267
        %s269 = smul.u32 2, %s27
        %v270 = vld [vmem:[%s220] sm:$0xff]
        %v271 = vld [vmem:[%s268] sm:$0xf]
        %v272 = vld [vmem:[%s263] sm:$0x3]
        %274 = vset.pattern.permute.xlu0 0
        %275 = vperm.xlu0 %274, %v271
        %v276 = vpop.permute.xlu0 %275
        %v279 = vlaneseq
        %v280 = vshrl.u32 %v279, 7
        %v281 = vsub.s32 0, %v280
        %v282 = vrot.slane %v272, %v281
        %v283 = vlaneseq
        %v284 = vshrl.u32 %v283, 7
        %v285 = vsub.s32 1, %v284
        %v286 = vrot.slane %v272, %v285
        %v289 = vmul.f32 %v276, %v282
        %v290 = vmul.f32 %v276, %v286
        %v293 = vcombine.low %v289, %v290
        %v295 = vadd.f32 %v270, %v293
        %296 = vst [vmem:[%s254] sm:$0xff] %v295
        %s297 = sand.u32 %s135, 1
        %s298 = scalar_lea.sflag [#allocation4], %s297
        %s299 = sand.u32 %s135, 1
        %s300 = smul.addr %s299, 8
        %s301 = scalar_lea.vmem [#allocation5], %s300
        // Predicated region
        $region37: #{tpu_custom_call.1} parent=31 // pred_check
          %p302 = pneg %p145
        $region38: #{tpu_custom_call.1} parent=31 // pred_check_branch
          %304 = sbr.rel (%p302) target = $region40
        $region39: #{tpu_custom_call.1} parent=31 // pred_region
          %s305 = smul.u32 2, %s27
          %s307 = ssub.s32 128, 128
          %308 = vsyncadd %s298, %s307
          %s309 = smul.addr %s26, 2
          %s310 = sadd.s32 %s305, %s309
          %s311 = smul.addr %s25, 2
          %s312 = sadd.s32 %s310, %s311
          %s313 = smul.addr %s312, 64
          %s314 = scalar_lea.hbm %s3, %s313
          %s316 = sshll.u32 %s301, 4
          %s317 = int_to_ptr.vmem [resolvable:$true] %s316
          %319 = dma.vmem_to_hbm [thread:$0]  %s317, 128, %s314, %s298
        $region40: #{tpu_custom_call.1} parent=31 // pred_fallthru
          _
      $region32: #{tpu_custom_call.1} parent=5 // pred_fallthru
        _
      %p320 = scmp.le.s32.totalorder 2, %s15
      // Predicated region
      $region41: #{tpu_custom_call.1} parent=5 // pred_check
        %p321 = pneg %p320
      $region42: #{tpu_custom_call.1} parent=5 // pred_check_branch
        %323 = sbr.rel (%p321) target = $region44
      $region43: #{tpu_custom_call.1} parent=5 // pred_region
        %s324 = ssub.s32 %s15, 2
        // Predicated region
        $region45: #{tpu_custom_call.1} parent=43 // pred_check
          %p325 = pneg %p151
        $region46: #{tpu_custom_call.1} parent=43 // pred_check_branch
          %327 = sbr.rel (%p325) target = $region48
        $region47: #{tpu_custom_call.1} parent=43 // pred_region
          %s328 = sand.u32 %s136, 1
          %s329 = scalar_lea.sflag [#allocation4], %s328
          %s330 = sand.u32 %s136, 1
          %s331 = smul.addr %s330, 8
          %s332 = scalar_lea.vmem [#allocation5], %s331
          %333 = dma.done %s329, 128
        $region48: #{tpu_custom_call.1} parent=43 // pred_fallthru
          _
      $region44: #{tpu_custom_call.1} parent=5 // pred_fallthru
        _
    $region6: #{tpu_custom_call.1} parent=1 // loop_footer
      %s19 = sadd.s32 1, %s15
    $region7: #{tpu_custom_call.1} parent=1 // loop_footer_branch
      %14 = sbr.rel target = $region3
    $region8: #{tpu_custom_call.1} parent=1 // loop_exit
      _
    %334 = vsyncpa [#allocation3], 1
    %s335 = scalar_lea.sflag [#allocation3], 1
    %336 = vsyncpa %s335, 1
    %337 = vsyncpa [#allocation4], 1
    %s338 = scalar_lea.sflag [#allocation4], 1
    %339 = vsyncpa %s338, 1

</llo_original>
